<compile_context>
chip_gen: v7x
topology: tpu7x:2x2x1
jax: 0.10.0
libtpu: 0.0.40
codegen_flags: <defaults>
</compile_context>

<pallas_src>
import jax
import jax.numpy as jnp
from jax.experimental import pallas as pl
from jax.experimental.pallas import tpu as pltpu


def _var_cost_kernel(dx_ref, dy_ref, wreg_ref, wobs_ref, out_ref):
    """One grid step: per-tile partial weighted sum-of-squares + NaN counts.

    dx_ref, dy_ref     : VMEM (tile_b, C, H*W), native input dtype
    wreg_ref, wobs_ref : VMEM (1, C, 1) f32, alpha^2 * W_c^2 (resident blocks)
    out_ref            : VMEM (8, 128) f32 partial-output block:
                         sublane 0 -> weighted SSQ of dx, 1 -> NaN count of dx,
                         sublane 2 -> weighted SSQ of dy, 3 -> NaN count of dy.
    """

    def tile_partial(x_ref, w_ref):
        x = x_ref[...]                                       # native dtype
        nan = jnp.isnan(x)
        # Mask in the native dtype (bf16 packs 2/lane on v6e/v7x), then upcast
        # only for the square/accumulate.
        xc = jnp.where(nan, jnp.zeros((), x.dtype), x).astype(jnp.float32)
        ssq = jnp.sum(xc * xc, axis=-1, keepdims=True)       # (tile_b, C, 1)
        wsum = jnp.sum(ssq * w_ref[...])                     # scalar f32
        # Exact per tile: tile element count << 2^24.
        nnan = jnp.sum(nan.astype(jnp.float32))              # scalar f32
        return wsum, nnan

    wsx, nnx = tile_partial(dx_ref, wreg_ref)
    wsy, nny = tile_partial(dy_ref, wobs_ref)

    sub = jax.lax.broadcasted_iota(jnp.int32, (8, 128), 0)
    out_ref[...] = jnp.where(
        sub == 0, wsx,
        jnp.where(sub == 1, nnx,
                  jnp.where(sub == 2, wsy,
                            jnp.where(sub == 3, nny, jnp.float32(0.0)))))


class ModelVarCostPallas:
    """JAX/Pallas equivalent of Model_Var_Cost (DimObs == 1, dimObsChannel=[0])."""

    def __init__(self, shape_data, dim_obs=1, dim_obs_channel=(0,), dim_state=0):
        c = int(shape_data[0])
        self.dim_obs = dim_obs
        self.dim_state = dim_state if dim_state > 0 else c
        # Deterministic parameter init exactly as in the PyTorch __init__.
        self.alphaObs = 0.1 * jnp.ones((dim_obs, 1), jnp.float32)
        self.alphaReg = jnp.array([0.9], jnp.float32)
        self.WObs = jnp.ones((dim_obs, c), jnp.float32)       # dimObsChannel[0] == 0 branch
        self.WReg = jnp.ones((self.dim_state,), jnp.float32)
        self.epsObs = 0.1 * jnp.ones((dim_obs,), jnp.float32)  # unused by weighted L2 norm
        self.epsReg = jnp.array([0.1], jnp.float32)

    def __call__(self, dx, dy, batch_tile=None):
        n, c, h, w = dx.shape
        hw = h * w

        # Pure reshapes of contiguous arrays (no HBM copy); native dtype on the wire.
        dx3 = dx.reshape(n, c, hw)
        dy3 = dy.reshape(n, c, hw)

        # Tiny resident per-channel weights with alpha^2 folded in.
        wreg = ((self.alphaReg[0] ** 2)
                * (self.WReg.astype(jnp.float32) ** 2)).reshape(1, c, 1)
        wobs = ((self.alphaObs[0, 0] ** 2)
                * (self.WObs[0].astype(jnp.float32) ** 2)).reshape(1, c, 1)

        # --- tile sizing (generation aware) --------------------------------
        itemsize = jnp.dtype(dx3.dtype).itemsize
        slab_bytes = c * hw * itemsize          # one batch item, one input
        try:
            vmem_cap = int(pltpu.get_tpu_info().vmem_capacity_bytes)
        except Exception:
            vmem_cap = 64 * 1024 * 1024         # conservative (v7x-sized) fallback
        if vmem_cap >= 96 * 1024 * 1024:        # v5e / v6e: 128 MiB physical VMEM
            target_tile_bytes = 8 * 1024 * 1024
            vmem_limit = 64 * 1024 * 1024
        else:                                   # v7x: 64 MiB physical VMEM
            target_tile_bytes = 4 * 1024 * 1024
            vmem_limit = 48 * 1024 * 1024

        max_b = max(1, target_tile_bytes // max(1, slab_bytes))
        if batch_tile is not None:
            max_b = min(max_b, max(1, int(batch_tile)))
        # Largest divisor of N within the budget -> never a ragged tile, never a pad.
        tile_b = 1
        for d in range(1, n + 1):
            if n % d == 0 and d <= max_b:
                tile_b = d
        grid_b = n // tile_b

        # Make sure the pipeline (2 inputs x 2 buffers + small weight/output
        # blocks) fits the scoped-VMEM limit.
        needed = 4 * tile_b * slab_bytes + (2 << 20)
        if needed > vmem_limit:
            # TODO(synk): add a second grid axis over H*W for very large slabs
            # instead of just raising the limit.
            vmem_limit = needed

        partials = pl.pallas_call(
            _var_cost_kernel,
            out_shape=jax.ShapeDtypeStruct((grid_b * 8, 128), jnp.float32),
            grid_spec=pltpu.PrefetchScalarGridSpec(
                num_scalar_prefetch=0,
                grid=(grid_b,),
                in_specs=[
                    pl.BlockSpec((tile_b, c, hw), lambda i: (i, 0, 0)),   # dx tile
                    pl.BlockSpec((tile_b, c, hw), lambda i: (i, 0, 0)),   # dy tile
                    pl.BlockSpec((1, c, 1), lambda i: (0, 0, 0)),         # wreg (resident)
                    pl.BlockSpec((1, c, 1), lambda i: (0, 0, 0)),         # wobs (resident)
                ],
                out_specs=pl.BlockSpec((8, 128), lambda i: (i, 0)),
            ),
            compiler_params=pltpu.CompilerParams(
                dimension_semantics=("parallel",),   # independent per-tile partials
                vmem_limit_bytes=int(vmem_limit),
            ),
        )(dx3, dy3, wreg, wobs)

        # --- tiny final reduction + normalization (wrapper-side) -----------
        parts = partials.reshape(grid_b, 8, 128)[:, :4, 0]    # (grid_b, 4)
        wsx = jnp.sum(parts[:, 0])
        wsy = jnp.sum(parts[:, 2])
        # Per-tile NaN counts are exact integers in f32; sum them exactly in
        # int32 (exact up to ~2.1e9 elements).
        nnx = jnp.sum(parts[:, 1].astype(jnp.int32))
        nny = jnp.sum(parts[:, 3].astype(jnp.int32))

        n_total = n * c * h * w
        c_f = jnp.float32(c)
        n_valid_x = (n_total - nnx).astype(jnp.float32)
        n_valid_y = (n_total - nny).astype(jnp.float32)
        # Matches PyTorch: an all-NaN input divides by zero (inf/nan), no guard.
        loss = wsx * (c_f / n_valid_x) + wsy * (c_f / n_valid_y)
        return loss, self.alphaReg, self.alphaObs


# ---------------------------------------------------------------------------
# Pure-JAX reference (mirrors Model_WeightedL2Norm + Model_Var_Cost.forward)
# ---------------------------------------------------------------------------
def _weighted_l2_ref(x, w):
    l = jnp.nansum(x.astype(jnp.float32) ** 2, axis=3)
    l = jnp.nansum(l, axis=2)
    l = jnp.nansum(l, axis=0)
    l = jnp.nansum(l * w)
    n_valid = jnp.sum(jnp.logical_not(jnp.isnan(x)).astype(jnp.float32))
    return l / (n_valid / x.shape[1])


def _var_cost_ref(model, dx, dy):
    loss = model.alphaReg[0] ** 2 * _weighted_l2_ref(dx, model.WReg ** 2)
    loss = loss + model.alphaObs[0, 0] ** 2 * _weighted_l2_ref(dy, model.WObs[0] ** 2)
    return loss


if __name__ == "__main__":
    key = jax.random.PRNGKey(0)
    k_dx, k_dy, k_dx2, k_dy2 = jax.random.split(key, 4)

    # --- test 1: small shape, single-tile grid -----------------------------
    N, C, H, W = 2, 4, 16, 16            # ShapeData[0] = C
    dx = jax.random.normal(k_dx, (N, C, H, W), jnp.float32)
    dy = jax.random.normal(k_dy, (N, C, H, W), jnp.float32)
    # a few NaNs to exercise the nansum / n_valid path
    dx = dx.at[0, 0, 0, 0].set(jnp.nan)
    dy = dy.at[1, 2, 3, 4].set(jnp.nan)
    dy = dy.at[0, 1, 5, 7].set(jnp.nan)

    model = ModelVarCostPallas(shape_data=(C, H, W), dim_obs=1,
                               dim_obs_channel=(0,), dim_state=0)

    loss, alpha_reg, alpha_obs = model(dx, dy)
    loss = jax.block_until_ready(loss)
    ref = _var_cost_ref(model, dx, dy)
    assert jnp.allclose(loss, ref, rtol=1e-5, atol=1e-5), (loss, ref)
    assert alpha_reg.shape == (1,) and alpha_obs.shape == (1, 1)

    # --- test 2: force a multi-tile grid (partial-output / parallel path) ---
    N2, C2 = 4, 4
    dx_b = jax.random.normal(k_dx2, (N2, C2, H, W), jnp.float32)
    dy_b = jax.random.normal(k_dy2, (N2, C2, H, W), jnp.float32)
    dx_b = dx_b.at[2, 3, 1, 1].set(jnp.nan)

    model_b = ModelVarCostPallas(shape_data=(C2, H, W), dim_obs=1,
                                 dim_obs_channel=(0,), dim_state=0)
    loss_b, _, _ = model_b(dx_b, dy_b, batch_tile=1)   # grid=(4,), 4 partial blocks
    loss_b = jax.block_until_ready(loss_b)
    ref_b = _var_cost_ref(model_b, dx_b, dy_b)
    assert jnp.allclose(loss_b, ref_b, rtol=1e-5, atol=1e-5), (loss_b, ref_b)

    print("KERNEL_OK")
</pallas_src>

<mosaic_0001>
module attributes {stable_mosaic.version = 11 : i64} {
  func.func @_var_cost_kernel(%arg0: i32, %arg1: memref<2x4x256xf32, #tpu.memory_space<vmem>>, %arg2: memref<2x4x256xf32, #tpu.memory_space<vmem>>, %arg3: memref<1x4x1xf32, #tpu.memory_space<vmem>>, %arg4: memref<1x4x1xf32, #tpu.memory_space<vmem>>, %arg5: memref<8x128xf32, #tpu.memory_space<vmem>>) attributes {dimension_semantics = [#tpu.dimension_semantics<parallel>], iteration_bounds = array<i64: 1>, scalar_prefetch = 0 : i64, scratch_operands = 0 : i64, tpu.core_type = #tpu.core_type<tc>, window_params = [{transform_indices = @transform_0, window_bounds = array<i64: 2, 4, 256>}, {transform_indices = @transform_1, window_bounds = array<i64: 2, 4, 256>}, {pipeline_mode = #tpu.pipeline_mode<synchronous>, transform_indices = @transform_2, window_bounds = array<i64: 1, 4, 1>}, {pipeline_mode = #tpu.pipeline_mode<synchronous>, transform_indices = @transform_3, window_bounds = array<i64: 1, 4, 1>}, {transform_indices = @transform_4, window_bounds = array<i64: 8, 128>}]} {
    %c0 = arith.constant 0 : index
    %c0_0 = arith.constant 0 : index
    %c0_1 = arith.constant 0 : index
    %0 = vector.load %arg1[%c0, %c0_0, %c0_1] : memref<2x4x256xf32, #tpu.memory_space<vmem>>, vector<2x4x256xf32>
    %1 = arith.cmpf one, %0, %0 : vector<2x4x256xf32>
    %cst = arith.constant 0.000000e+00 : f32
    %2 = vector.broadcast %cst : f32 to vector<2x4x256xf32>
    %3 = arith.select %1, %2, %0 : vector<2x4x256xi1>, vector<2x4x256xf32>
    %4 = arith.mulf %3, %3 : vector<2x4x256xf32>
    %cst_2 = arith.constant dense<0.000000e+00> : vector<2x4xf32>
    %5 = vector.multi_reduction <add>, %4, %cst_2 [2] : vector<2x4x256xf32> to vector<2x4xf32>
    %6 = vector.shape_cast %5 : vector<2x4xf32> to vector<2x4x1xf32>
    %c0_3 = arith.constant 0 : index
    %c0_4 = arith.constant 0 : index
    %c0_5 = arith.constant 0 : index
    %7 = vector.load %arg3[%c0_3, %c0_4, %c0_5] : memref<1x4x1xf32, #tpu.memory_space<vmem>>, vector<1x4x1xf32>
    %8 = vector.broadcast %7 : vector<1x4x1xf32> to vector<2x4x1xf32>
    %9 = arith.mulf %6, %8 : vector<2x4x1xf32>
    %10 = vector.shape_cast %9 : vector<2x4x1xf32> to vector<1x2x4x1xf32>
    %cst_6 = arith.constant dense<0.000000e+00> : vector<1xf32>
    %11 = vector.multi_reduction <add>, %10, %cst_6 [1, 2, 3] : vector<1x2x4x1xf32> to vector<1xf32>
    %12 = vector.shape_cast %11 : vector<1xf32> to vector<1x1x1x1xf32>
    %13 = vector.extract %12[0, 0, 0, 0] : f32 from vector<1x1x1x1xf32>
    %14 = arith.extui %1 : vector<2x4x256xi1> to vector<2x4x256xi32>
    %15 = arith.sitofp %14 : vector<2x4x256xi32> to vector<2x4x256xf32>
    %16 = vector.shape_cast %15 : vector<2x4x256xf32> to vector<1x2x4x256xf32>
    %cst_7 = arith.constant dense<0.000000e+00> : vector<1xf32>
    %17 = vector.multi_reduction <add>, %16, %cst_7 [1, 2, 3] : vector<1x2x4x256xf32> to vector<1xf32>
    %18 = vector.shape_cast %17 : vector<1xf32> to vector<1x1x1x1xf32>
    %19 = vector.extract %18[0, 0, 0, 0] : f32 from vector<1x1x1x1xf32>
    %c0_8 = arith.constant 0 : index
    %c0_9 = arith.constant 0 : index
    %c0_10 = arith.constant 0 : index
    %20 = vector.load %arg2[%c0_8, %c0_9, %c0_10] : memref<2x4x256xf32, #tpu.memory_space<vmem>>, vector<2x4x256xf32>
    %21 = arith.cmpf one, %20, %20 : vector<2x4x256xf32>
    %cst_11 = arith.constant 0.000000e+00 : f32
    %22 = vector.broadcast %cst_11 : f32 to vector<2x4x256xf32>
    %23 = arith.select %21, %22, %20 : vector<2x4x256xi1>, vector<2x4x256xf32>
    %24 = arith.mulf %23, %23 : vector<2x4x256xf32>
    %cst_12 = arith.constant dense<0.000000e+00> : vector<2x4xf32>
    %25 = vector.multi_reduction <add>, %24, %cst_12 [2] : vector<2x4x256xf32> to vector<2x4xf32>
    %26 = vector.shape_cast %25 : vector<2x4xf32> to vector<2x4x1xf32>
    %c0_13 = arith.constant 0 : index
    %c0_14 = arith.constant 0 : index
    %c0_15 = arith.constant 0 : index
    %27 = vector.load %arg4[%c0_13, %c0_14, %c0_15] : memref<1x4x1xf32, #tpu.memory_space<vmem>>, vector<1x4x1xf32>
    %28 = vector.broadcast %27 : vector<1x4x1xf32> to vector<2x4x1xf32>
    %29 = arith.mulf %26, %28 : vector<2x4x1xf32>
    %30 = vector.shape_cast %29 : vector<2x4x1xf32> to vector<1x2x4x1xf32>
    %cst_16 = arith.constant dense<0.000000e+00> : vector<1xf32>
    %31 = vector.multi_reduction <add>, %30, %cst_16 [1, 2, 3] : vector<1x2x4x1xf32> to vector<1xf32>
    %32 = vector.shape_cast %31 : vector<1xf32> to vector<1x1x1x1xf32>
    %33 = vector.extract %32[0, 0, 0, 0] : f32 from vector<1x1x1x1xf32>
    %34 = arith.extui %21 : vector<2x4x256xi1> to vector<2x4x256xi32>
    %35 = arith.sitofp %34 : vector<2x4x256xi32> to vector<2x4x256xf32>
    %36 = vector.shape_cast %35 : vector<2x4x256xf32> to vector<1x2x4x256xf32>
    %cst_17 = arith.constant dense<0.000000e+00> : vector<1xf32>
    %37 = vector.multi_reduction <add>, %36, %cst_17 [1, 2, 3] : vector<1x2x4x256xf32> to vector<1xf32>
    %38 = vector.shape_cast %37 : vector<1xf32> to vector<1x1x1x1xf32>
    %39 = vector.extract %38[0, 0, 0, 0] : f32 from vector<1x1x1x1xf32>
    %40 = tpu.iota {dimensions = array<i32: 0>} : vector<8x128xi32>
    %c0_i32 = arith.constant 0 : i32
    %41 = vector.broadcast %c0_i32 : i32 to vector<8x128xi32>
    %42 = arith.cmpi eq, %40, %41 : vector<8x128xi32>
    %c1_i32 = arith.constant 1 : i32
    %43 = vector.broadcast %c1_i32 : i32 to vector<8x128xi32>
    %44 = arith.cmpi eq, %40, %43 : vector<8x128xi32>
    %c2_i32 = arith.constant 2 : i32
    %45 = vector.broadcast %c2_i32 : i32 to vector<8x128xi32>
    %46 = arith.cmpi eq, %40, %45 : vector<8x128xi32>
    %c3_i32 = arith.constant 3 : i32
    %47 = vector.broadcast %c3_i32 : i32 to vector<8x128xi32>
    %48 = arith.cmpi eq, %40, %47 : vector<8x128xi32>
    %cst_18 = arith.constant 0.000000e+00 : f32
    %49 = vector.broadcast %39 : f32 to vector<8x128xf32>
    %50 = vector.broadcast %cst_18 : f32 to vector<8x128xf32>
    %51 = arith.select %48, %49, %50 : vector<8x128xi1>, vector<8x128xf32>
    %52 = vector.broadcast %33 : f32 to vector<8x128xf32>
    %53 = arith.select %46, %52, %51 : vector<8x128xi1>, vector<8x128xf32>
    %54 = vector.broadcast %19 : f32 to vector<8x128xf32>
    %55 = arith.select %44, %54, %53 : vector<8x128xi1>, vector<8x128xf32>
    %56 = vector.broadcast %13 : f32 to vector<8x128xf32>
    %57 = arith.select %42, %56, %55 : vector<8x128xi1>, vector<8x128xf32>
    %c0_19 = arith.constant 0 : index
    %c0_20 = arith.constant 0 : index
    %58 = vector.load %arg5[%c0_19, %c0_20] : memref<8x128xf32, #tpu.memory_space<vmem>>, vector<8x128xf32>
    tpu.vector_store %arg5[%c0_19, %c0_20], %57 {strides = array<i32>} : memref<8x128xf32, #tpu.memory_space<vmem>>, vector<8x128xf32>,
    return
  }
  func.func @transform_0(%arg0: i32) -> (i32, i32, i32) {
    %c0_i32 = arith.constant 0 : i32
    %c0_i32_0 = arith.constant 0 : i32
    %c0_i32_1 = arith.constant 0 : i32
    return %arg0, %c0_i32, %c0_i32_0 : i32, i32, i32
  }
  func.func @transform_1(%arg0: i32) -> (i32, i32, i32) {
    %c0_i32 = arith.constant 0 : i32
    %c0_i32_0 = arith.constant 0 : i32
    %c0_i32_1 = arith.constant 0 : i32
    return %arg0, %c0_i32, %c0_i32_0 : i32, i32, i32
  }
  func.func @transform_2(%arg0: i32) -> (i32, i32, i32) {
    %c0_i32 = arith.constant 0 : i32
    %c0_i32_0 = arith.constant 0 : i32
    %c0_i32_1 = arith.constant 0 : i32
    %c0_i32_2 = arith.constant 0 : i32
    return %c0_i32, %c0_i32_0, %c0_i32_1 : i32, i32, i32
  }
  func.func @transform_3(%arg0: i32) -> (i32, i32, i32) {
    %c0_i32 = arith.constant 0 : i32
    %c0_i32_0 = arith.constant 0 : i32
    %c0_i32_1 = arith.constant 0 : i32
    %c0_i32_2 = arith.constant 0 : i32
    return %c0_i32, %c0_i32_0, %c0_i32_1 : i32, i32, i32
  }
  func.func @transform_4(%arg0: i32) -> (i32, i32) {
    %c0_i32 = arith.constant 0 : i32
    %c0_i32_0 = arith.constant 0 : i32
    return %arg0, %c0_i32 : i32, i32
  }
}

</mosaic_0001>

<llo_original>
// kernel: tpu_custom_call.1
$region0: #{tpu_custom_call.1}
  #allocation0 [shape = 'u32[]', space=smem, size = 0x4, offset = 0x4, fixed_abs, tag = 'smem constant byte address 0x4 - core index']
  #allocation1 [shape = 'u32[144,128]{1,0:T(1,128)}', space=vmem, size = 0x12000, scoped, tag = 'internal scratch']
  %s0 = inlined_call_operand.hbm [shape: f32[2,4,256], index: 0, kind: input, shape index: {}]
  %s1 = inlined_call_operand.hbm [shape: f32[2,4,256], index: 1, kind: input, shape index: {}]
  %s2 = inlined_call_operand.vmem [shape: f32[1,4,1], index: 2, kind: input, shape index: {}]
  %s3 = inlined_call_operand.vmem [shape: f32[1,4,1], index: 3, kind: input, shape index: {}]
  %s4 = inlined_call_operand.hbm [shape: f32[8,128], index: 4, kind: output, shape index: {}]
  %s5 = sld [smem:[#allocation0]]
  $region34: #{tpu_custom_call.1} parent=0
    _
  %s7 = ssub.s32 1, %s5
  %s8 = scalar_select 0, %s7, %s5
  $region1: #{tpu_custom_call.1} parent=0
    #allocation2 [shape = 'u8[8192]{0}', space=vmem, size = 0x2000, scoped, tag = 'input window, operand 0, single buffered']
    #allocation3 [shape = 's32[1]{0}', space=sflag, size = 0x4, scoped, tag = 'scoped memory for tpu_custom_call.1']
    #allocation4 [shape = 's32[1]{0}', space=sflag, size = 0x4, scoped, tag = 'scoped memory for tpu_custom_call.1']
    #allocation5 [shape = 'u8[8192]{0}', space=vmem, size = 0x2000, scoped, tag = 'input window, operand 1, single buffered']
    #allocation6 [shape = 's32[1]{0}', space=sflag, size = 0x4, scoped, tag = 'scoped memory for tpu_custom_call.1']
    #allocation7 [shape = 'u8[4096]{0}', space=vmem, size = 0x1000, scoped, tag = 'output window, operand 0, single buffered']
    %9 = vsyncpa [#allocation3], 0
    %10 = vsyncpa [#allocation6], 0
    %11 = vsyncpa [#allocation4], 0
    // Predicated region
    $region2: #{tpu_custom_call.1} parent=1 // pred_check
      _
    $region3: #{tpu_custom_call.1} parent=1 // pred_check_branch
      %13 = sbr.rel (0) target = $region5
    $region4: #{tpu_custom_call.1} parent=1 // pred_region
      %s15 = ssub.s32 256, 256
      %16 = vsyncadd [#allocation3], %s15
      %s17 = sshll.u32 [#allocation2], 4
      %s18 = int_to_ptr.vmem [resolvable:$true] %s17
      %23 = dma.hbm_to_vmem [thread:$0]  %s0, 256, %s18, [#allocation3], 128, 128, 8
    $region5: #{tpu_custom_call.1} parent=1 // pred_fallthru
      _
    // Predicated region
    $region6: #{tpu_custom_call.1} parent=1 // pred_check
      _
    $region7: #{tpu_custom_call.1} parent=1 // pred_check_branch
      %25 = sbr.rel (0) target = $region9
    $region8: #{tpu_custom_call.1} parent=1 // pred_region
      %s27 = ssub.s32 256, 256
      %28 = vsyncadd [#allocation6], %s27
      %s29 = sshll.u32 [#allocation5], 4
      %s30 = int_to_ptr.vmem [resolvable:$true] %s29
      %35 = dma.hbm_to_vmem [thread:$0]  %s1, 256, %s30, [#allocation6], 128, 128, 8
    $region9: #{tpu_custom_call.1} parent=1 // pred_fallthru
      _
    // Predicated region
    $region10: #{tpu_custom_call.1} parent=1 // pred_check
      _
    $region11: #{tpu_custom_call.1} parent=1 // pred_check_branch
      %37 = sbr.rel (0) target = $region13
    $region12: #{tpu_custom_call.1} parent=1 // pred_region
      _
    $region13: #{tpu_custom_call.1} parent=1 // pred_fallthru
      _
    // Predicated region
    $region14: #{tpu_custom_call.1} parent=1 // pred_check
      _
    $region15: #{tpu_custom_call.1} parent=1 // pred_check_branch
      %39 = sbr.rel (0) target = $region17
    $region16: #{tpu_custom_call.1} parent=1 // pred_region
      _
    $region17: #{tpu_custom_call.1} parent=1 // pred_fallthru
      _
    // Predicated region
    $region18: #{tpu_custom_call.1} parent=1 // pred_check
      _
    $region19: #{tpu_custom_call.1} parent=1 // pred_check_branch
      %41 = sbr.rel (0) target = $region21
    $region20: #{tpu_custom_call.1} parent=1 // pred_region
      %42 = dma.done [#allocation3], 256
    $region21: #{tpu_custom_call.1} parent=1 // pred_fallthru
      _
    // Predicated region
    $region22: #{tpu_custom_call.1} parent=1 // pred_check
      _
    $region23: #{tpu_custom_call.1} parent=1 // pred_check_branch
      %44 = sbr.rel (0) target = $region25
    $region24: #{tpu_custom_call.1} parent=1 // pred_region
      %45 = dma.done [#allocation6], 256
    $region25: #{tpu_custom_call.1} parent=1 // pred_fallthru
      _
    %v46 = vld [vmem:[#allocation2] sm:$0xff]
    %v47 = vld [vmem:[#allocation2 + $0x8] sm:$0xff]
    %vm48 = vcmp.ne.f32.partialorder %v46, %v46
    %vm49 = vcmp.ne.f32.partialorder %v47, %v47
    %v50 = vsel %vm48, 0.0, %v46
    %v51 = vsel %vm49, 0.0, %v47
    %v52 = vmul.f32 %v50, %v50
    %v53 = vmul.f32 %v51, %v51
    %v56 = vcombine.high %v52, %v52
    %v57 = vcombine.high %v53, %v53
    %vm60 = vcmask 1043456
    %v61 = vsel %vm60, %v52, 0.0
    %v62 = vsel %vm60, %v56, 0.0
    %v63 = vadd.f32 %v61, %v62
    %64 = vadd.xlane.f32.xlu0 %v63
    %v65 = vpop.xlane.xlu0 %64
    %v66 = vsel %vm60, %v53, 0.0
    %v67 = vsel %vm60, %v57, 0.0
    %v68 = vadd.f32 %v66, %v67
    %69 = vadd.xlane.f32.xlu0 %v68
    %v70 = vpop.xlane.xlu0 %69
    %v71 = vld [vmem:[%s2] sm:$0xf]
    %v72 = vmul.f32 %v65, %v71
    %v73 = vmul.f32 %v70, %v71
    %vm74 = vcmask 3072
    %v75 = vsel %vm74, %v72, 0.0
    %v76 = vsel %vm74, %v73, 0.0
    %v77 = vadd.f32 %v75, %v76
    %78 = vadd.xlane.f32.xlu0 %v77
    %v79 = vpop.xlane.xlu0 %78
    %v80 = vrot.slane %v79, 4
    %v81 = vadd.f32 %v79, %v80
    %v82 = vrot.slane %v81, 2
    %v83 = vadd.f32 %v81, %v82
    %v84 = vrot.slane %v83, 1
    %v85 = vadd.f32 %v83, %v84
    %s86 = vtos %v85
    %v87 = vsel %vm48, 1, 0
    %v88 = vsel %vm49, 1, 0
    %v89 = vcvt.s32.f32 %v87
    %v90 = vcvt.s32.f32 %v88
    %v93 = vcombine.high %v89, %v89
    %v94 = vcombine.high %v90, %v90
    %v97 = vsel %vm60, %v89, 0.0
    %v98 = vsel %vm60, %v93, 0.0
    %v99 = vadd.f32 %v97, %v98
    %v100 = vsel %vm60, %v90, 0.0
    %v101 = vadd.f32 %v99, %v100
    %v102 = vsel %vm60, %v94, 0.0
    %v103 = vadd.f32 %v101, %v102
    %104 = vadd.xlane.f32.xlu0 %v103
    %v105 = vpop.xlane.xlu0 %104
    %v106 = vrot.slane %v105, 4
    %v107 = vadd.f32 %v105, %v106
    %v108 = vrot.slane %v107, 2
    %v109 = vadd.f32 %v107, %v108
    %v110 = vrot.slane %v109, 1
    %v111 = vadd.f32 %v109, %v110
    %s112 = vtos %v111
    %v113 = vld [vmem:[#allocation5] sm:$0xff]
    %v114 = vld [vmem:[#allocation5 + $0x8] sm:$0xff]
    %vm115 = vcmp.ne.f32.partialorder %v113, %v113
    %vm116 = vcmp.ne.f32.partialorder %v114, %v114
    %v117 = vsel %vm115, 0.0, %v113
    %v118 = vsel %vm116, 0.0, %v114
    %v119 = vmul.f32 %v117, %v117
    %v120 = vmul.f32 %v118, %v118
    %v123 = vcombine.high %v119, %v119
    %v124 = vcombine.high %v120, %v120
    %v127 = vsel %vm60, %v119, 0.0
    %v128 = vsel %vm60, %v123, 0.0
    %v129 = vadd.f32 %v127, %v128
    %130 = vadd.xlane.f32.xlu0 %v129
    %v131 = vpop.xlane.xlu0 %130
    %v132 = vsel %vm60, %v120, 0.0
    %v133 = vsel %vm60, %v124, 0.0
    %v134 = vadd.f32 %v132, %v133
    %135 = vadd.xlane.f32.xlu0 %v134
    %v136 = vpop.xlane.xlu0 %135
    %v137 = vld [vmem:[%s3] sm:$0xf]
    %v138 = vmul.f32 %v131, %v137
    %v139 = vmul.f32 %v136, %v137
    %v140 = vsel %vm74, %v138, 0.0
    %v141 = vsel %vm74, %v139, 0.0
    %v142 = vadd.f32 %v140, %v141
    %143 = vadd.xlane.f32.xlu0 %v142
    %v144 = vpop.xlane.xlu0 %143
    %v145 = vrot.slane %v144, 4
    %v146 = vadd.f32 %v144, %v145
    %v147 = vrot.slane %v146, 2
    %v148 = vadd.f32 %v146, %v147
    %v149 = vrot.slane %v148, 1
    %v150 = vadd.f32 %v148, %v149
    %s151 = vtos %v150
    %v152 = vsel %vm115, 1, 0
    %v153 = vsel %vm116, 1, 0
    %v154 = vcvt.s32.f32 %v152
    %v155 = vcvt.s32.f32 %v153
    %v158 = vcombine.high %v154, %v154
    %v159 = vcombine.high %v155, %v155
    %v162 = vsel %vm60, %v154, 0.0
    %v163 = vsel %vm60, %v158, 0.0
    %v164 = vadd.f32 %v162, %v163
    %v165 = vsel %vm60, %v155, 0.0
    %v166 = vadd.f32 %v164, %v165
    %v167 = vsel %vm60, %v159, 0.0
    %v168 = vadd.f32 %v166, %v167
    %169 = vadd.xlane.f32.xlu0 %v168
    %v170 = vpop.xlane.xlu0 %169
    %v171 = vrot.slane %v170, 4
    %v172 = vadd.f32 %v170, %v171
    %v173 = vrot.slane %v172, 2
    %v174 = vadd.f32 %v172, %v173
    %v175 = vrot.slane %v174, 1
    %v176 = vadd.f32 %v174, %v175
    %s177 = vtos %v176
    %v178 = vlaneseq
    %v179 = vshrl.u32 %v178, 7
    %vm180 = vcmp.eq.s32.totalorder %v179, 0
    %vm181 = vcmp.eq.s32.totalorder %v179, 1
    %vm182 = vcmp.eq.s32.totalorder %v179, 2
    %vm183 = vcmp.eq.s32.totalorder %v179, 3
    %v184 = vstv %s177
    %v185 = vsel %vm183, %v184, 0.0
    %v186 = vstv %s151
    %v187 = vsel %vm182, %v186, %v185
    %v188 = vstv %s112
    %v189 = vsel %vm181, %v188, %v187
    %v190 = vstv %s86
    %v191 = vsel %vm180, %v190, %v189
    %192 = vst [vmem:[#allocation7] sm:$0xff] %v191
    // Predicated region
    $region26: #{tpu_custom_call.1} parent=1 // pred_check
      _
    $region27: #{tpu_custom_call.1} parent=1 // pred_check_branch
      %194 = sbr.rel (0) target = $region29
    $region28: #{tpu_custom_call.1} parent=1 // pred_region
      %s196 = ssub.s32 128, 128
      %197 = vsyncadd [#allocation4], %s196
      %s199 = sshll.u32 [#allocation7], 4
      %s200 = int_to_ptr.vmem [resolvable:$true] %s199
      %202 = dma.vmem_to_hbm [thread:$0]  %s200, 128, %s4, [#allocation4]
    $region29: #{tpu_custom_call.1} parent=1 // pred_fallthru
      _
    // Predicated region
    $region30: #{tpu_custom_call.1} parent=1 // pred_check
      _
    $region31: #{tpu_custom_call.1} parent=1 // pred_check_branch
      %204 = sbr.rel (0) target = $region33
    $region32: #{tpu_custom_call.1} parent=1 // pred_region
      %205 = dma.done [#allocation4], 128
    $region33: #{tpu_custom_call.1} parent=1 // pred_fallthru
      _
    %206 = vsyncpa [#allocation3], 1
    %207 = vsyncpa [#allocation6], 1
    %208 = vsyncpa [#allocation4], 1

</llo_original>
